<compile_context>
chip_gen: v6e
topology: v6e:2x2x1
jax: 0.10.0
libtpu: 0.0.40
codegen_flags: <defaults>
</compile_context>

<pallas_src>
import functools

import jax
import jax.numpy as jnp
from jax.experimental import pallas as pl
from jax.experimental.pallas import tpu as pltpu


def _round_up(x, m):
    return ((x + m - 1) // m) * m


def _critic_kernel(x_ref, w1_ref, w2_ref, w3_ref, b1_ref, b2_ref, b3_ref,
                   out_ref):
    """One batch tile: x is (in_pad, tb); output is (8, tb) (rows 0/1 = Q1/Q2)."""
    x = x_ref[...]                                              # (in_pad, tb)

    # Layer 1 (both heads fused, single matmul).
    h = jnp.dot(w1_ref[...], x, preferred_element_type=jnp.float32)
    h = jnp.maximum(h + b1_ref[...], 0.0)                       # (h2, tb)

    # Layer 2 (block-diagonal fused hidden layer).
    h = jnp.dot(w2_ref[...], h, preferred_element_type=jnp.float32)
    h = jnp.maximum(h + b2_ref[...], 0.0)                       # (h2, tb)

    # Layer 3: row 0 = Q1, row 1 = Q2, rows 2..7 are zero padding.
    q = jnp.dot(w3_ref[...], h, preferred_element_type=jnp.float32)
    out_ref[...] = q + b3_ref[...]                              # (8, tb)


def pack_critic_params(params, obs_dim, action_dim, hidden_dim):
    """Pack the 12 per-head tensors into pre-transposed fused weights (run once)."""
    w1a, b1a, w2a, b2a, w3a, b3a = params["q1"]
    w1b, b1b, w2b, b2b, w3b, b3b = params["q2"]

    in_dim = obs_dim + action_dim
    in_pad = _round_up(in_dim, 8)
    h2 = 2 * hidden_dim

    # Layer 1: heads side by side, transposed, K zero-padded to in_pad.
    w1t = jnp.zeros((h2, in_pad), jnp.float32)
    w1t = w1t.at[:hidden_dim, :in_dim].set(w1a.T)
    w1t = w1t.at[hidden_dim:, :in_dim].set(w1b.T)

    # Layer 2: block-diagonal, transposed.
    w2t = jnp.zeros((h2, h2), jnp.float32)
    w2t = w2t.at[:hidden_dim, :hidden_dim].set(w2a.T)
    w2t = w2t.at[hidden_dim:, hidden_dim:].set(w2b.T)

    # Layer 3: Q1 head -> output row 0, Q2 head -> output row 1 (8 rows total).
    w3t = jnp.zeros((8, h2), jnp.float32)
    w3t = w3t.at[0, :hidden_dim].set(w3a[:, 0])
    w3t = w3t.at[1, hidden_dim:].set(w3b[:, 0])

    b1 = jnp.concatenate([b1a[0], b1b[0]]).reshape(h2, 1)
    b2 = jnp.concatenate([b2a[0], b2b[0]]).reshape(h2, 1)
    b3 = jnp.zeros((8, 1), jnp.float32)
    b3 = b3.at[0, 0].set(b3a[0, 0]).at[1, 0].set(b3b[0, 0])

    return (w1t, w2t, w3t, b1, b2, b3)


def _choose_batch_tile(batch, block_batch):
    """Pick (tile, padded_batch): big tiles, minimal padding, >=2 steps if large."""
    bp = _round_up(max(batch, 8), 8)
    if bp <= 1024:
        # Small/medium batch: single tile, minimal padding (best on 1-TC chips).
        return bp, bp
    # Large batch: >=2 grid steps so both v7x TensorCores get work; tiles are a
    # multiple of 128 lanes (lane-dense blocks) and capped at block_batch.
    n_steps = max(2, -(-bp // block_batch))
    tb = _round_up(-(-bp // n_steps), 128)
    return tb, _round_up(bp, tb)


def critic_forward(obs, action, packed, block_batch=2048):
    """Pallas implementation of Critic.forward (encoder=None)."""
    assert obs.shape[0] == action.shape[0]
    w1t, w2t, w3t, b1, b2, b3 = packed

    batch = obs.shape[0]
    in_dim = obs.shape[1] + action.shape[1]
    h2, in_pad = w1t.shape
    assert in_dim <= in_pad

    tb, b_padded = _choose_batch_tile(batch, block_batch)

    # One fused copy in XLA: concat(obs, action) -> transpose -> zero-pad.
    x_t = jnp.concatenate([obs, action], axis=1).T              # (in_dim, B)
    if in_pad != in_dim or b_padded != batch:
        x_t = jnp.pad(x_t, ((0, in_pad - in_dim), (0, b_padded - batch)))

    out = pl.pallas_call(
        _critic_kernel,
        out_shape=jax.ShapeDtypeStruct((8, b_padded), jnp.float32),
        grid=(b_padded // tb,),
        in_specs=[
            pl.BlockSpec((in_pad, tb), lambda i: (0, i)),   # activations
            pl.BlockSpec((h2, in_pad), lambda i: (0, 0)),   # W1^T (resident)
            pl.BlockSpec((h2, h2), lambda i: (0, 0)),       # W2^T (resident)
            pl.BlockSpec((8, h2), lambda i: (0, 0)),        # W3^T (resident)
            pl.BlockSpec((h2, 1), lambda i: (0, 0)),        # b1
            pl.BlockSpec((h2, 1), lambda i: (0, 0)),        # b2
            pl.BlockSpec((8, 1), lambda i: (0, 0)),         # b3
        ],
        out_specs=pl.BlockSpec((8, tb), lambda i: (0, i)),
        compiler_params=pltpu.CompilerParams(
            dimension_semantics=("parallel",)),
    )(x_t, w1t, w2t, w3t, b1, b2, b3)

    # Rows 0/1 of the lane-dense output are Q1/Q2; padded batch columns dropped.
    q1 = out[0, :batch][:, None]
    q2 = out[1, :batch][:, None]
    return q1, q2


def init_qfunction_params(key, in_dim, hidden_dim):
    """Deterministic synthetic init for one QFunction MLP (shapes from __init__)."""
    ks = jax.random.split(key, 6)
    scale = 0.1
    w1 = scale * jax.random.normal(ks[0], (in_dim, hidden_dim), jnp.float32)
    b1 = scale * jax.random.normal(ks[1], (1, hidden_dim), jnp.float32)
    w2 = scale * jax.random.normal(ks[2], (hidden_dim, hidden_dim), jnp.float32)
    b2 = scale * jax.random.normal(ks[3], (1, hidden_dim), jnp.float32)
    w3 = scale * jax.random.normal(ks[4], (hidden_dim, 1), jnp.float32)
    b3 = scale * jax.random.normal(ks[5], (1, 1), jnp.float32)
    return [w1, b1, w2, b2, w3, b3]


def reference_forward(obs, action, params):
    """Plain-JAX reference matching the PyTorch semantics."""
    x = jnp.concatenate([obs, action], axis=1)

    def mlp(p):
        w1, b1, w2, b2, w3, b3 = p
        h = jnp.maximum(x @ w1 + b1, 0.0)
        h = jnp.maximum(h @ w2 + b2, 0.0)
        return h @ w3 + b3

    return mlp(params["q1"]), mlp(params["q2"])


if __name__ == "__main__":
    key = jax.random.PRNGKey(0)
    k_obs, k_act, k_q1, k_q2 = jax.random.split(key, 4)

    batch = 8
    obs_dim = 32      # encoder=None -> input_dim = obs_dim
    action_dim = 8
    hidden_dim = 32

    obs = jax.random.normal(k_obs, (batch, obs_dim), jnp.float32)
    action = jax.random.normal(k_act, (batch, action_dim), jnp.float32)

    params = {
        "q1": init_qfunction_params(k_q1, obs_dim + action_dim, hidden_dim),
        "q2": init_qfunction_params(k_q2, obs_dim + action_dim, hidden_dim),
    }

    # Packing is hoisted out of the forward path: done ONCE here, not per call.
    packed = pack_critic_params(params, obs_dim, action_dim, hidden_dim)

    # TODO(synk): encoder is None in this configuration; an encoder forward pass
    # is out of scope for this kernel.
    fwd = jax.jit(critic_forward)
    q1, q2 = fwd(obs, action, packed)
    q1 = jax.block_until_ready(q1)
    q2 = jax.block_until_ready(q2)

    r1, r2 = reference_forward(obs, action, params)
    assert q1.shape == (batch, 1) and q2.shape == (batch, 1)
    assert jnp.allclose(q1, r1, atol=1e-4, rtol=1e-4), "Q1 mismatch vs reference"
    assert jnp.allclose(q2, r2, atol=1e-4, rtol=1e-4), "Q2 mismatch vs reference"

    print("KERNEL_OK")
</pallas_src>

<mosaic_0001>
module attributes {stable_mosaic.version = 11 : i64} {
  func.func @_critic_kernel(%arg0: i32, %arg1: memref<40x8xf32, #tpu.memory_space<vmem>>, %arg2: memref<64x40xf32, #tpu.memory_space<vmem>>, %arg3: memref<64x64xf32, #tpu.memory_space<vmem>>, %arg4: memref<8x64xf32, #tpu.memory_space<vmem>>, %arg5: memref<64x1xf32, #tpu.memory_space<vmem>>, %arg6: memref<64x1xf32, #tpu.memory_space<vmem>>, %arg7: memref<8x1xf32, #tpu.memory_space<vmem>>, %arg8: memref<8x8xf32, #tpu.memory_space<vmem>>) attributes {dimension_semantics = [#tpu.dimension_semantics<parallel>], iteration_bounds = array<i64: 1>, scalar_prefetch = 0 : i64, scratch_operands = 0 : i64, tpu.core_type = #tpu.core_type<tc>, window_params = [{transform_indices = @transform_0, window_bounds = array<i64: 40, 8>}, {pipeline_mode = #tpu.pipeline_mode<synchronous>, transform_indices = @transform_1, window_bounds = array<i64: 64, 40>}, {pipeline_mode = #tpu.pipeline_mode<synchronous>, transform_indices = @transform_2, window_bounds = array<i64: 64, 64>}, {pipeline_mode = #tpu.pipeline_mode<synchronous>, transform_indices = @transform_3, window_bounds = array<i64: 8, 64>}, {pipeline_mode = #tpu.pipeline_mode<synchronous>, transform_indices = @transform_4, window_bounds = array<i64: 64, 1>}, {pipeline_mode = #tpu.pipeline_mode<synchronous>, transform_indices = @transform_5, window_bounds = array<i64: 64, 1>}, {pipeline_mode = #tpu.pipeline_mode<synchronous>, transform_indices = @transform_6, window_bounds = array<i64: 8, 1>}, {transform_indices = @transform_7, window_bounds = array<i64: 8, 8>}]} {
    %c0 = arith.constant 0 : index
    %c0_0 = arith.constant 0 : index
    %0 = vector.load %arg1[%c0, %c0_0] : memref<40x8xf32, #tpu.memory_space<vmem>>, vector<40x8xf32>
    %c0_1 = arith.constant 0 : index
    %c0_2 = arith.constant 0 : index
    %1 = vector.load %arg2[%c0_1, %c0_2] : memref<64x40xf32, #tpu.memory_space<vmem>>, vector<64x40xf32>
    %cst = arith.constant dense<0.000000e+00> : vector<64x8xf32>
    %2 = tpu.matmul %1, %0, %cst {dimension_numbers = #tpu.dot_dimension_numbers<[1], [0], [0], [1], [0, 0, 1, 1], [], []>} : vector<64x40xf32>, vector<40x8xf32>, vector<64x8xf32> -> vector<64x8xf32>
    %c0_3 = arith.constant 0 : index
    %c0_4 = arith.constant 0 : index
    %3 = vector.load %arg5[%c0_3, %c0_4] : memref<64x1xf32, #tpu.memory_space<vmem>>, vector<64x1xf32>
    %4 = vector.broadcast %3 : vector<64x1xf32> to vector<64x8xf32>
    %5 = arith.addf %2, %4 : vector<64x8xf32>
    %cst_5 = arith.constant 0.000000e+00 : f32
    %6 = vector.broadcast %cst_5 : f32 to vector<64x8xf32>
    %7 = arith.maximumf %5, %6 : vector<64x8xf32>
    %c0_6 = arith.constant 0 : index
    %c0_7 = arith.constant 0 : index
    %8 = vector.load %arg3[%c0_6, %c0_7] : memref<64x64xf32, #tpu.memory_space<vmem>>, vector<64x64xf32>
    %cst_8 = arith.constant dense<0.000000e+00> : vector<64x8xf32>
    %9 = tpu.matmul %8, %7, %cst_8 {dimension_numbers = #tpu.dot_dimension_numbers<[1], [0], [0], [1], [0, 0, 1, 1], [], []>} : vector<64x64xf32>, vector<64x8xf32>, vector<64x8xf32> -> vector<64x8xf32>
    %c0_9 = arith.constant 0 : index
    %c0_10 = arith.constant 0 : index
    %10 = vector.load %arg6[%c0_9, %c0_10] : memref<64x1xf32, #tpu.memory_space<vmem>>, vector<64x1xf32>
    %11 = vector.broadcast %10 : vector<64x1xf32> to vector<64x8xf32>
    %12 = arith.addf %9, %11 : vector<64x8xf32>
    %cst_11 = arith.constant 0.000000e+00 : f32
    %13 = vector.broadcast %cst_11 : f32 to vector<64x8xf32>
    %14 = arith.maximumf %12, %13 : vector<64x8xf32>
    %c0_12 = arith.constant 0 : index
    %c0_13 = arith.constant 0 : index
    %15 = vector.load %arg4[%c0_12, %c0_13] : memref<8x64xf32, #tpu.memory_space<vmem>>, vector<8x64xf32>
    %cst_14 = arith.constant dense<0.000000e+00> : vector<8x8xf32>
    %16 = tpu.matmul %15, %14, %cst_14 {dimension_numbers = #tpu.dot_dimension_numbers<[1], [0], [0], [1], [0, 0, 1, 1], [], []>} : vector<8x64xf32>, vector<64x8xf32>, vector<8x8xf32> -> vector<8x8xf32>
    %c0_15 = arith.constant 0 : index
    %c0_16 = arith.constant 0 : index
    %17 = vector.load %arg7[%c0_15, %c0_16] : memref<8x1xf32, #tpu.memory_space<vmem>>, vector<8x1xf32>
    %18 = vector.broadcast %17 : vector<8x1xf32> to vector<8x8xf32>
    %19 = arith.addf %16, %18 : vector<8x8xf32>
    %c0_17 = arith.constant 0 : index
    %c0_18 = arith.constant 0 : index
    %20 = vector.load %arg8[%c0_17, %c0_18] : memref<8x8xf32, #tpu.memory_space<vmem>>, vector<8x8xf32>
    tpu.vector_store %arg8[%c0_17, %c0_18], %19 {strides = array<i32>} : memref<8x8xf32, #tpu.memory_space<vmem>>, vector<8x8xf32>,
    return
  }
  func.func @transform_0(%arg0: i32) -> (i32, i32) {
    %c0_i32 = arith.constant 0 : i32
    %c0_i32_0 = arith.constant 0 : i32
    return %c0_i32, %arg0 : i32, i32
  }
  func.func @transform_1(%arg0: i32) -> (i32, i32) {
    %c0_i32 = arith.constant 0 : i32
    %c0_i32_0 = arith.constant 0 : i32
    %c0_i32_1 = arith.constant 0 : i32
    return %c0_i32, %c0_i32_0 : i32, i32
  }
  func.func @transform_2(%arg0: i32) -> (i32, i32) {
    %c0_i32 = arith.constant 0 : i32
    %c0_i32_0 = arith.constant 0 : i32
    %c0_i32_1 = arith.constant 0 : i32
    return %c0_i32, %c0_i32_0 : i32, i32
  }
  func.func @transform_3(%arg0: i32) -> (i32, i32) {
    %c0_i32 = arith.constant 0 : i32
    %c0_i32_0 = arith.constant 0 : i32
    %c0_i32_1 = arith.constant 0 : i32
    return %c0_i32, %c0_i32_0 : i32, i32
  }
  func.func @transform_4(%arg0: i32) -> (i32, i32) {
    %c0_i32 = arith.constant 0 : i32
    %c0_i32_0 = arith.constant 0 : i32
    %c0_i32_1 = arith.constant 0 : i32
    return %c0_i32, %c0_i32_0 : i32, i32
  }
  func.func @transform_5(%arg0: i32) -> (i32, i32) {
    %c0_i32 = arith.constant 0 : i32
    %c0_i32_0 = arith.constant 0 : i32
    %c0_i32_1 = arith.constant 0 : i32
    return %c0_i32, %c0_i32_0 : i32, i32
  }
  func.func @transform_6(%arg0: i32) -> (i32, i32) {
    %c0_i32 = arith.constant 0 : i32
    %c0_i32_0 = arith.constant 0 : i32
    %c0_i32_1 = arith.constant 0 : i32
    return %c0_i32, %c0_i32_0 : i32, i32
  }
  func.func @transform_7(%arg0: i32) -> (i32, i32) {
    %c0_i32 = arith.constant 0 : i32
    %c0_i32_0 = arith.constant 0 : i32
    return %c0_i32, %arg0 : i32, i32
  }
}

</mosaic_0001>

<llo_original>
// kernel: critic_forward.1
$region0: #{critic_forward.1}
  #allocation0 [shape = 'u32[]', space=smem, size = 0x4, offset = 0x4, fixed_abs, tag = 'smem constant byte address 0x4 - core index']
  #allocation1 [shape = 'u32[144,128]{1,0:T(1,128)}', space=vmem, size = 0x12000, scoped, tag = 'internal scratch']
  %s0 = inlined_call_operand.vmem [shape: f32[40,8], index: 0, kind: input, shape index: {}]
  %s1 = inlined_call_operand.vmem [shape: f32[64,40], index: 1, kind: input, shape index: {}]
  %s2 = inlined_call_operand.vmem [shape: f32[64,64], index: 2, kind: input, shape index: {}]
  %s3 = inlined_call_operand.vmem [shape: f32[8,64], index: 3, kind: input, shape index: {}]
  %s4 = inlined_call_operand.vmem [shape: f32[64,1], index: 4, kind: input, shape index: {}]
  %s5 = inlined_call_operand.vmem [shape: f32[64,1], index: 5, kind: input, shape index: {}]
  %s6 = inlined_call_operand.vmem [shape: f32[8,1], index: 6, kind: input, shape index: {}]
  %s7 = inlined_call_operand.vmem [shape: f32[8,8], index: 7, kind: output, shape index: {}]
  %s8 = sld [smem:[#allocation0]]
  $region38: #{critic_forward.1} parent=0
    _
  %s10 = ssub.s32 1, %s8
  %s11 = scalar_select 0, %s10, %s8
  // Predicated region
  $region2: #{critic_forward.1} parent=0 // pred_check
    _
  $region3: #{critic_forward.1} parent=0 // pred_check_branch
    %13 = sbr.rel (0) target = $region5
  $region4: #{critic_forward.1} parent=0 // pred_region
    _
  $region5: #{critic_forward.1} parent=0 // pred_fallthru
    _
  // Predicated region
  $region6: #{critic_forward.1} parent=0 // pred_check
    _
  $region7: #{critic_forward.1} parent=0 // pred_check_branch
    %15 = sbr.rel (0) target = $region9
  $region8: #{critic_forward.1} parent=0 // pred_region
    _
  $region9: #{critic_forward.1} parent=0 // pred_fallthru
    _
  // Predicated region
  $region10: #{critic_forward.1} parent=0 // pred_check
    _
  $region11: #{critic_forward.1} parent=0 // pred_check_branch
    %17 = sbr.rel (0) target = $region13
  $region12: #{critic_forward.1} parent=0 // pred_region
    _
  $region13: #{critic_forward.1} parent=0 // pred_fallthru
    _
  // Predicated region
  $region14: #{critic_forward.1} parent=0 // pred_check
    _
  $region15: #{critic_forward.1} parent=0 // pred_check_branch
    %19 = sbr.rel (0) target = $region17
  $region16: #{critic_forward.1} parent=0 // pred_region
    _
  $region17: #{critic_forward.1} parent=0 // pred_fallthru
    _
  // Predicated region
  $region18: #{critic_forward.1} parent=0 // pred_check
    _
  $region19: #{critic_forward.1} parent=0 // pred_check_branch
    %21 = sbr.rel (0) target = $region21
  $region20: #{critic_forward.1} parent=0 // pred_region
    _
  $region21: #{critic_forward.1} parent=0 // pred_fallthru
    _
  // Predicated region
  $region22: #{critic_forward.1} parent=0 // pred_check
    _
  $region23: #{critic_forward.1} parent=0 // pred_check_branch
    %23 = sbr.rel (0) target = $region25
  $region24: #{critic_forward.1} parent=0 // pred_region
    _
  $region25: #{critic_forward.1} parent=0 // pred_fallthru
    _
  // Predicated region
  $region26: #{critic_forward.1} parent=0 // pred_check
    _
  $region27: #{critic_forward.1} parent=0 // pred_check_branch
    %25 = sbr.rel (0) target = $region29
  $region28: #{critic_forward.1} parent=0 // pred_region
    _
  $region29: #{critic_forward.1} parent=0 // pred_fallthru
    _
  %v26 = vld [vmem:[%s0] sm:$0xff]
  %v27 = vld [vmem:[%s0 + $0x8] sm:$0xff]
  %v28 = vld [vmem:[%s0 + $0x10] sm:$0xff]
  %v29 = vld [vmem:[%s0 + $0x18] sm:$0xff]
  %v30 = vld [vmem:[%s0 + $0x20] sm:$0xff]
  %v31 = vld [vmem:[%s1] sm:$0xff]
  %v32 = vld [vmem:[%s1 + $0x8] sm:$0xff]
  %v33 = vld [vmem:[%s1 + $0x10] sm:$0xff]
  %v34 = vld [vmem:[%s1 + $0x18] sm:$0xff]
  %v35 = vld [vmem:[%s1 + $0x20] sm:$0xff]
  %v36 = vld [vmem:[%s1 + $0x28] sm:$0xff]
  %v37 = vld [vmem:[%s1 + $0x30] sm:$0xff]
  %v38 = vld [vmem:[%s1 + $0x38] sm:$0xff]
  %v39 = vld [vmem:[%s4] sm:$0xff]
  %v40 = vld [vmem:[%s4 + $0x8] sm:$0xff]
  %v41 = vld [vmem:[%s4 + $0x10] sm:$0xff]
  %v42 = vld [vmem:[%s4 + $0x18] sm:$0xff]
  %v43 = vld [vmem:[%s4 + $0x20] sm:$0xff]
  %v44 = vld [vmem:[%s4 + $0x28] sm:$0xff]
  %v45 = vld [vmem:[%s4 + $0x30] sm:$0xff]
  %v46 = vld [vmem:[%s4 + $0x38] sm:$0xff]
  %48 = vset.pattern.permute.xlu0 0
  %49 = vperm.xlu0 %48, %v39
  %v50 = vpop.permute.xlu0 %49
  %53 = vset.pattern.permute.xlu0 0
  %54 = vperm.xlu0 %53, %v40
  %v55 = vpop.permute.xlu0 %54
  %58 = vset.pattern.permute.xlu0 0
  %59 = vperm.xlu0 %58, %v41
  %v60 = vpop.permute.xlu0 %59
  %63 = vset.pattern.permute.xlu0 0
  %64 = vperm.xlu0 %63, %v42
  %v65 = vpop.permute.xlu0 %64
  %68 = vset.pattern.permute.xlu0 0
  %69 = vperm.xlu0 %68, %v43
  %v70 = vpop.permute.xlu0 %69
  %73 = vset.pattern.permute.xlu0 0
  %74 = vperm.xlu0 %73, %v44
  %v75 = vpop.permute.xlu0 %74
  %78 = vset.pattern.permute.xlu0 0
  %79 = vperm.xlu0 %78, %v45
  %v80 = vpop.permute.xlu0 %79
  %83 = vset.pattern.permute.xlu0 0
  %84 = vperm.xlu0 %83, %v46
  %v85 = vpop.permute.xlu0 %84
  %vm87 = vcmask 326656
  %v89 = vsel %vm87, %v31, 0
  %v92 = vsel %vm87, %v32, 0
  %v95 = vsel %vm87, %v33, 0
  %v98 = vsel %vm87, %v34, 0
  %v101 = vsel %vm87, %v35, 0
  %v104 = vsel %vm87, %v36, 0
  %v107 = vsel %vm87, %v37, 0
  %v110 = vsel %vm87, %v38, 0
  %112 = vmatprep.subr.mxu0 0.0
  %113 = vmatpush1.msra.mxu0 0.0
  %114 = vmatprep.subr.mxu0 0.0
  %115 = vmatpush1.msra.mxu0 0.0
  %116 = vmatprep.subr.mxu0 0.0
  %117 = vmatpush1.msra.mxu0 0.0
  %118 = vmatprep.subr.mxu0 0.0
  %119 = vmatpush1.msra.mxu0 0.0
  %120 = vmatprep.subr.mxu0 0.0
  %121 = vmatpush1.msra.mxu0 0.0
  %122 = vmatprep.subr.mxu0 0.0
  %123 = vmatpush1.msra.mxu0 0.0
  %124 = vmatprep.subr.mxu0 0.0
  %125 = vmatpush1.msra.mxu0 0.0
  %126 = vmatprep.subr.mxu0 0.0
  %127 = vmatpush1.msra.mxu0 0.0
  %128 = vmatprep.subr.mxu0 0.0
  %129 = vmatpush1.msra.mxu0 0.0
  %130 = vmatprep.subr.mxu0 0.0
  %131 = vmatpush1.msra.mxu0 0.0
  %132 = vmatprep.subr.mxu0 0.0
  %133 = vmatpush1.msra.mxu0 0.0
  %134 = vmatprep.subr.mxu0 0.0
  %135 = vmatpush1.msra.mxu0 %v30
  %136 = vmatprep.subr.mxu0 0.0
  %137 = vmatpush1.msra.mxu0 %v29
  %138 = vmatprep.subr.mxu0 0.0
  %139 = vmatpush1.msra.mxu0 %v28
  %140 = vmatprep.subr.mxu0 0.0
  %141 = vmatpush1.msra.mxu0 %v27
  %142 = vmatprep.subr.mxu0 0.0
  %143 = vmatpush1.msra.mxu0 %v26
  %144 = vmatprep.subr.mxu0 0.0
  %145 = vmatpush2.msra.mxu0 0.0
  %146 = vmatprep.subr.mxu0 0.0
  %147 = vmatpush2.msra.mxu0 0.0
  %148 = vmatprep.subr.mxu0 0.0
  %149 = vmatpush2.msra.mxu0 0.0
  %150 = vmatprep.subr.mxu0 0.0
  %151 = vmatpush2.msra.mxu0 0.0
  %152 = vmatprep.subr.mxu0 0.0
  %153 = vmatpush2.msra.mxu0 0.0
  %154 = vmatprep.subr.mxu0 0.0
  %155 = vmatpush2.msra.mxu0 0.0
  %156 = vmatprep.subr.mxu0 0.0
  %157 = vmatpush2.msra.mxu0 0.0
  %158 = vmatprep.subr.mxu0 0.0
  %159 = vmatpush2.msra.mxu0 0.0
  %160 = vmatprep.subr.mxu0 0.0
  %161 = vmatpush2.msra.mxu0 0.0
  %162 = vmatprep.subr.mxu0 0.0
  %163 = vmatpush2.msra.mxu0 0.0
  %164 = vmatprep.subr.mxu0 0.0
  %165 = vmatpush2.msra.mxu0 0.0
  %166 = vmatprep.subr.mxu0 0.0
  %167 = vmatpush2.msra.mxu0 0.0
  %168 = vmatprep.subr.mxu0 0.0
  %169 = vmatpush2.msra.mxu0 0.0
  %170 = vmatprep.subr.mxu0 0.0
  %171 = vmatpush2.msra.mxu0 0.0
  %172 = vmatprep.subr.mxu0 0.0
  %173 = vmatpush2.msra.mxu0 0.0
  %174 = vmatprep.subr.mxu0 0.0
  %175 = vmatpush2.msra.mxu0 0.0
  %176 = vmatprep.mubr.f32.mxu0 0.0
  %177 = vmatmul.mubr.f32.gmra.mxu0 %v89
  %v178 = vpop.f32.mrf.mxu0
  %v179 = vadd.f32 %v50, %v178
  %v180 = vpop.f32.mrf.mxu0
  %181 = vmatprep.mubr.f32.mxu0 0.0
  %182 = vmatmul.mubr.f32.gmra.mxu0 %v92
  %v183 = vpop.f32.mrf.mxu0
  %v184 = vadd.f32 %v55, %v183
  %v185 = vpop.f32.mrf.mxu0
  %186 = vmatprep.mubr.f32.mxu0 0.0
  %187 = vmatmul.mubr.f32.gmra.mxu0 %v95
  %v188 = vpop.f32.mrf.mxu0
  %v189 = vadd.f32 %v60, %v188
  %v190 = vpop.f32.mrf.mxu0
  %191 = vmatprep.mubr.f32.mxu0 0.0
  %192 = vmatmul.mubr.f32.gmra.mxu0 %v98
  %v193 = vpop.f32.mrf.mxu0
  %v194 = vadd.f32 %v65, %v193
  %v195 = vpop.f32.mrf.mxu0
  %196 = vmatprep.mubr.f32.mxu0 0.0
  %197 = vmatmul.mubr.f32.gmra.mxu0 %v101
  %v198 = vpop.f32.mrf.mxu0
  %v199 = vadd.f32 %v70, %v198
  %v200 = vpop.f32.mrf.mxu0
  %201 = vmatprep.mubr.f32.mxu0 0.0
  %202 = vmatmul.mubr.f32.gmra.mxu0 %v104
  %v203 = vpop.f32.mrf.mxu0
  %v204 = vadd.f32 %v75, %v203
  %v205 = vpop.f32.mrf.mxu0
  %206 = vmatprep.mubr.f32.mxu0 0.0
  %207 = vmatmul.mubr.f32.gmra.mxu0 %v107
  %v208 = vpop.f32.mrf.mxu0
  %v209 = vadd.f32 %v80, %v208
  %v210 = vpop.f32.mrf.mxu0
  %211 = vmatprep.mubr.f32.mxu0 0.0
  %212 = vmatmul.mubr.f32.gmra.mxu0 %v110
  %v213 = vpop.f32.mrf.mxu0
  %v214 = vadd.f32 %v85, %v213
  %v215 = vpop.f32.mrf.mxu0
  %216 = vdwg.mxu0
  %v217 = vmax.f32 %v179, 0.0
  %v218 = vmax.f32 %v184, 0.0
  %v219 = vmax.f32 %v189, 0.0
  %v220 = vmax.f32 %v194, 0.0
  %v221 = vmax.f32 %v199, 0.0
  %v222 = vmax.f32 %v204, 0.0
  %v223 = vmax.f32 %v209, 0.0
  %v224 = vmax.f32 %v214, 0.0
  %v225 = vld [vmem:[%s2] sm:$0xff]
  %v226 = vld [vmem:[%s2 + $0x8] sm:$0xff]
  %v227 = vld [vmem:[%s2 + $0x10] sm:$0xff]
  %v228 = vld [vmem:[%s2 + $0x18] sm:$0xff]
  %v229 = vld [vmem:[%s2 + $0x20] sm:$0xff]
  %v230 = vld [vmem:[%s2 + $0x28] sm:$0xff]
  %v231 = vld [vmem:[%s2 + $0x30] sm:$0xff]
  %v232 = vld [vmem:[%s2 + $0x38] sm:$0xff]
  %v233 = vld [vmem:[%s5] sm:$0xff]
  %v234 = vld [vmem:[%s5 + $0x8] sm:$0xff]
  %v235 = vld [vmem:[%s5 + $0x10] sm:$0xff]
  %v236 = vld [vmem:[%s5 + $0x18] sm:$0xff]
  %v237 = vld [vmem:[%s5 + $0x20] sm:$0xff]
  %v238 = vld [vmem:[%s5 + $0x28] sm:$0xff]
  %v239 = vld [vmem:[%s5 + $0x30] sm:$0xff]
  %v240 = vld [vmem:[%s5 + $0x38] sm:$0xff]
  %242 = vset.pattern.permute.xlu0 0
  %243 = vperm.xlu0 %242, %v233
  %v244 = vpop.permute.xlu0 %243
  %247 = vset.pattern.permute.xlu0 0
  %248 = vperm.xlu0 %247, %v234
  %v249 = vpop.permute.xlu0 %248
  %252 = vset.pattern.permute.xlu0 0
  %253 = vperm.xlu0 %252, %v235
  %v254 = vpop.permute.xlu0 %253
  %257 = vset.pattern.permute.xlu0 0
  %258 = vperm.xlu0 %257, %v236
  %v259 = vpop.permute.xlu0 %258
  %262 = vset.pattern.permute.xlu0 0
  %263 = vperm.xlu0 %262, %v237
  %v264 = vpop.permute.xlu0 %263
  %267 = vset.pattern.permute.xlu0 0
  %268 = vperm.xlu0 %267, %v238
  %v269 = vpop.permute.xlu0 %268
  %272 = vset.pattern.permute.xlu0 0
  %273 = vperm.xlu0 %272, %v239
  %v274 = vpop.permute.xlu0 %273
  %277 = vset.pattern.permute.xlu0 0
  %278 = vperm.xlu0 %277, %v240
  %v279 = vpop.permute.xlu0 %278
  %vm281 = vcmask 523264
  %v283 = vsel %vm281, %v225, 0
  %v286 = vsel %vm281, %v226, 0
  %v289 = vsel %vm281, %v227, 0
  %v292 = vsel %vm281, %v228, 0
  %v295 = vsel %vm281, %v229, 0
  %v298 = vsel %vm281, %v230, 0
  %v301 = vsel %vm281, %v231, 0
  %v304 = vsel %vm281, %v232, 0
  %306 = vmatprep.subr.mxu0 0.0
  %307 = vmatpush1.msra.mxu0 0.0
  %308 = vmatprep.subr.mxu0 0.0
  %309 = vmatpush1.msra.mxu0 0.0
  %310 = vmatprep.subr.mxu0 0.0
  %311 = vmatpush1.msra.mxu0 0.0
  %312 = vmatprep.subr.mxu0 0.0
  %313 = vmatpush1.msra.mxu0 0.0
  %314 = vmatprep.subr.mxu0 0.0
  %315 = vmatpush1.msra.mxu0 0.0
  %316 = vmatprep.subr.mxu0 0.0
  %317 = vmatpush1.msra.mxu0 0.0
  %318 = vmatprep.subr.mxu0 0.0
  %319 = vmatpush1.msra.mxu0 0.0
  %320 = vmatprep.subr.mxu0 0.0
  %321 = vmatpush1.msra.mxu0 0.0
  %322 = vmatprep.subr.mxu0 0.0
  %323 = vmatpush1.msra.mxu0 %v224
  %324 = vmatprep.subr.mxu0 0.0
  %325 = vmatpush1.msra.mxu0 %v223
  %326 = vmatprep.subr.mxu0 0.0
  %327 = vmatpush1.msra.mxu0 %v222
  %328 = vmatprep.subr.mxu0 0.0
  %329 = vmatpush1.msra.mxu0 %v221
  %330 = vmatprep.subr.mxu0 0.0
  %331 = vmatpush1.msra.mxu0 %v220
  %332 = vmatprep.subr.mxu0 0.0
  %333 = vmatpush1.msra.mxu0 %v219
  %334 = vmatprep.subr.mxu0 0.0
  %335 = vmatpush1.msra.mxu0 %v218
  %336 = vmatprep.subr.mxu0 0.0
  %337 = vmatpush1.msra.mxu0 %v217
  %338 = vmatprep.subr.mxu0 0.0
  %339 = vmatpush2.msra.mxu0 0.0
  %340 = vmatprep.subr.mxu0 0.0
  %341 = vmatpush2.msra.mxu0 0.0
  %342 = vmatprep.subr.mxu0 0.0
  %343 = vmatpush2.msra.mxu0 0.0
  %344 = vmatprep.subr.mxu0 0.0
  %345 = vmatpush2.msra.mxu0 0.0
  %346 = vmatprep.subr.mxu0 0.0
  %347 = vmatpush2.msra.mxu0 0.0
  %348 = vmatprep.subr.mxu0 0.0
  %349 = vmatpush2.msra.mxu0 0.0
  %350 = vmatprep.subr.mxu0 0.0
  %351 = vmatpush2.msra.mxu0 0.0
  %352 = vmatprep.subr.mxu0 0.0
  %353 = vmatpush2.msra.mxu0 0.0
  %354 = vmatprep.subr.mxu0 0.0
  %355 = vmatpush2.msra.mxu0 0.0
  %356 = vmatprep.subr.mxu0 0.0
  %357 = vmatpush2.msra.mxu0 0.0
  %358 = vmatprep.subr.mxu0 0.0
  %359 = vmatpush2.msra.mxu0 0.0
  %360 = vmatprep.subr.mxu0 0.0
  %361 = vmatpush2.msra.mxu0 0.0
  %362 = vmatprep.subr.mxu0 0.0
  %363 = vmatpush2.msra.mxu0 0.0
  %364 = vmatprep.subr.mxu0 0.0
  %365 = vmatpush2.msra.mxu0 0.0
  %366 = vmatprep.subr.mxu0 0.0
  %367 = vmatpush2.msra.mxu0 0.0
  %368 = vmatprep.subr.mxu0 0.0
  %369 = vmatpush2.msra.mxu0 0.0
  %370 = vmatprep.mubr.f32.mxu0 0.0
  %371 = vmatmul.mubr.f32.gmra.mxu0 %v283
  %v372 = vpop.f32.mrf.mxu0
  %v373 = vadd.f32 %v244, %v372
  %v374 = vpop.f32.mrf.mxu0
  %375 = vmatprep.mubr.f32.mxu0 0.0
  %376 = vmatmul.mubr.f32.gmra.mxu0 %v286
  %v377 = vpop.f32.mrf.mxu0
  %v378 = vadd.f32 %v249, %v377
  %v379 = vpop.f32.mrf.mxu0
  %380 = vmatprep.mubr.f32.mxu0 0.0
  %381 = vmatmul.mubr.f32.gmra.mxu0 %v289
  %v382 = vpop.f32.mrf.mxu0
  %v383 = vadd.f32 %v254, %v382
  %v384 = vpop.f32.mrf.mxu0
  %385 = vmatprep.mubr.f32.mxu0 0.0
  %386 = vmatmul.mubr.f32.gmra.mxu0 %v292
  %v387 = vpop.f32.mrf.mxu0
  %v388 = vadd.f32 %v259, %v387
  %v389 = vpop.f32.mrf.mxu0
  %390 = vmatprep.mubr.f32.mxu0 0.0
  %391 = vmatmul.mubr.f32.gmra.mxu0 %v295
  %v392 = vpop.f32.mrf.mxu0
  %v393 = vadd.f32 %v264, %v392
  %v394 = vpop.f32.mrf.mxu0
  %395 = vmatprep.mubr.f32.mxu0 0.0
  %396 = vmatmul.mubr.f32.gmra.mxu0 %v298
  %v397 = vpop.f32.mrf.mxu0
  %v398 = vadd.f32 %v269, %v397
  %v399 = vpop.f32.mrf.mxu0
  %400 = vmatprep.mubr.f32.mxu0 0.0
  %401 = vmatmul.mubr.f32.gmra.mxu0 %v301
  %v402 = vpop.f32.mrf.mxu0
  %v403 = vadd.f32 %v274, %v402
  %v404 = vpop.f32.mrf.mxu0
  %405 = vmatprep.mubr.f32.mxu0 0.0
  %406 = vmatmul.mubr.f32.gmra.mxu0 %v304
  %v407 = vpop.f32.mrf.mxu0
  %v408 = vadd.f32 %v279, %v407
  %v409 = vpop.f32.mrf.mxu0
  %410 = vdwg.mxu0
  %v411 = vmax.f32 %v373, 0.0
  %v412 = vmax.f32 %v378, 0.0
  %v413 = vmax.f32 %v383, 0.0
  %v414 = vmax.f32 %v388, 0.0
  %v415 = vmax.f32 %v393, 0.0
  %v416 = vmax.f32 %v398, 0.0
  %v417 = vmax.f32 %v403, 0.0
  %v418 = vmax.f32 %v408, 0.0
  %v419 = vld [vmem:[%s3] sm:$0xff]
  %v420 = vld [vmem:[%s6] sm:$0xff]
  %422 = vset.pattern.permute.xlu0 0
  %423 = vperm.xlu0 %422, %v420
  %v424 = vpop.permute.xlu0 %423
  %v427 = vsel %vm281, %v419, 0
  %429 = vmatprep.subr.mxu0 0.0
  %430 = vmatpush1.msra.mxu0 0.0
  %431 = vmatprep.subr.mxu0 0.0
  %432 = vmatpush1.msra.mxu0 0.0
  %433 = vmatprep.subr.mxu0 0.0
  %434 = vmatpush1.msra.mxu0 0.0
  %435 = vmatprep.subr.mxu0 0.0
  %436 = vmatpush1.msra.mxu0 0.0
  %437 = vmatprep.subr.mxu0 0.0
  %438 = vmatpush1.msra.mxu0 0.0
  %439 = vmatprep.subr.mxu0 0.0
  %440 = vmatpush1.msra.mxu0 0.0
  %441 = vmatprep.subr.mxu0 0.0
  %442 = vmatpush1.msra.mxu0 0.0
  %443 = vmatprep.subr.mxu0 0.0
  %444 = vmatpush1.msra.mxu0 0.0
  %445 = vmatprep.subr.mxu0 0.0
  %446 = vmatpush1.msra.mxu0 %v418
  %447 = vmatprep.subr.mxu0 0.0
  %448 = vmatpush1.msra.mxu0 %v417
  %449 = vmatprep.subr.mxu0 0.0
  %450 = vmatpush1.msra.mxu0 %v416
  %451 = vmatprep.subr.mxu0 0.0
  %452 = vmatpush1.msra.mxu0 %v415
  %453 = vmatprep.subr.mxu0 0.0
  %454 = vmatpush1.msra.mxu0 %v414
  %455 = vmatprep.subr.mxu0 0.0
  %456 = vmatpush1.msra.mxu0 %v413
  %457 = vmatprep.subr.mxu0 0.0
  %458 = vmatpush1.msra.mxu0 %v412
  %459 = vmatprep.subr.mxu0 0.0
  %460 = vmatpush1.msra.mxu0 %v411
  %461 = vmatprep.subr.mxu0 0.0
  %462 = vmatpush2.msra.mxu0 0.0
  %463 = vmatprep.subr.mxu0 0.0
  %464 = vmatpush2.msra.mxu0 0.0
  %465 = vmatprep.subr.mxu0 0.0
  %466 = vmatpush2.msra.mxu0 0.0
  %467 = vmatprep.subr.mxu0 0.0
  %468 = vmatpush2.msra.mxu0 0.0
  %469 = vmatprep.subr.mxu0 0.0
  %470 = vmatpush2.msra.mxu0 0.0
  %471 = vmatprep.subr.mxu0 0.0
  %472 = vmatpush2.msra.mxu0 0.0
  %473 = vmatprep.subr.mxu0 0.0
  %474 = vmatpush2.msra.mxu0 0.0
  %475 = vmatprep.subr.mxu0 0.0
  %476 = vmatpush2.msra.mxu0 0.0
  %477 = vmatprep.subr.mxu0 0.0
  %478 = vmatpush2.msra.mxu0 0.0
  %479 = vmatprep.subr.mxu0 0.0
  %480 = vmatpush2.msra.mxu0 0.0
  %481 = vmatprep.subr.mxu0 0.0
  %482 = vmatpush2.msra.mxu0 0.0
  %483 = vmatprep.subr.mxu0 0.0
  %484 = vmatpush2.msra.mxu0 0.0
  %485 = vmatprep.subr.mxu0 0.0
  %486 = vmatpush2.msra.mxu0 0.0
  %487 = vmatprep.subr.mxu0 0.0
  %488 = vmatpush2.msra.mxu0 0.0
  %489 = vmatprep.subr.mxu0 0.0
  %490 = vmatpush2.msra.mxu0 0.0
  %491 = vmatprep.subr.mxu0 0.0
  %492 = vmatpush2.msra.mxu0 0.0
  %493 = vmatprep.mubr.f32.mxu0 0.0
  %494 = vmatmul.mubr.f32.gmra.mxu0 %v427
  %v495 = vpop.f32.mrf.mxu0
  %v496 = vadd.f32 %v424, %v495
  %v497 = vpop.f32.mrf.mxu0
  %498 = vdwg.mxu0
  %vm499 = vcmask 64512
  %500 = vst.msk [vmem:[%s7] sm:$0xff] %vm499, %v496
  // Predicated region
  $region30: #{critic_forward.1} parent=0 // pred_check
    _
  $region31: #{critic_forward.1} parent=0 // pred_check_branch
    %502 = sbr.rel (0) target = $region33
  $region32: #{critic_forward.1} parent=0 // pred_region
    _
  $region33: #{critic_forward.1} parent=0 // pred_fallthru
    _
  // Predicated region
  $region34: #{critic_forward.1} parent=0 // pred_check
    _
  $region35: #{critic_forward.1} parent=0 // pred_check_branch
    %504 = sbr.rel (0) target = $region37
  $region36: #{critic_forward.1} parent=0 // pred_region
    _
  $region37: #{critic_forward.1} parent=0 // pred_fallthru
    _

</llo_original>
